<compile_context>
chip_gen: v5e
topology: v5e:2x2
jax: 0.10.0
libtpu: 0.0.40
codegen_flags: <defaults>
</compile_context>

<pallas_src>
import numpy as np
import jax
import jax.numpy as jnp
from jax.experimental import pallas as pl
from jax.experimental.pallas import tpu as pltpu

_DENSE_MAX = 512        # dense path when dy*do and dy*di are <= this ...
_DENSE_DY_MAX = 8       # ... and dy is small (dense matrix is only 2/dy nonzero)
_TN_MAX = 8192          # max lane tile (multiple of 128)
_FULL_N = 512           # below this, use a single full-N block (always legal)

_VMEM_CHOICE = None     # cached (tile budget, vmem_limit_bytes)


def _vmem_budget():
    """Per-generation VMEM (tile budget, compiler limit) in bytes."""
    global _VMEM_CHOICE
    if _VMEM_CHOICE is None:
        try:
            cap = int(getattr(pltpu.get_tpu_info(), "vmem_capacity_bytes"))
        except Exception:
            cap = 64 * 1024 * 1024                       # be conservative
        if cap >= 100 * 1024 * 1024:                      # v5e / v6e: 128 MiB
            _VMEM_CHOICE = (56 * 1024 * 1024, 80 * 1024 * 1024)
        else:                                             # v7x: 64 MiB
            _VMEM_CHOICE = (24 * 1024 * 1024, 32 * 1024 * 1024)
    return _VMEM_CHOICE


def _pick_tn(n, per_col_bytes, fixed_bytes, budget):
    """Lane tile: full-N for small N, else the largest multiple of 128 that fits
    the VMEM budget, capped so the lane grid keeps >=4 steps (v7x megacore)."""
    if n <= _FULL_N:
        return n                                   # full-N block: layout-legal
    avail = max(budget - fixed_bytes, 0)
    tn = min(_TN_MAX, (avail // max(per_col_bytes, 1)) // 128 * 128)
    quarter = max(128, (n // 4) // 128 * 128)      # keep >=4 grid steps
    return max(128, min(tn, quarter))


# ---------------------------------------------------------------------------
# Dense fast path: one (dy*do, dy*di) @ (dy*di, TN) matmul per N tile.
# ---------------------------------------------------------------------------

def _dense_kernel(w_ref, x_ref, o_ref):
    o_ref[...] = jnp.dot(w_ref[...], x_ref[...],
                         preferred_element_type=jnp.float32).astype(o_ref.dtype)


def _dense_bias_kernel(w_ref, x_ref, b_ref, o_ref):
    acc = jnp.dot(w_ref[...], x_ref[...], preferred_element_type=jnp.float32)
    o_ref[...] = (acc + b_ref[...]).astype(o_ref.dtype)


def _build_dense_weight(w_upper, w_lower, dtype):
    """Block-diag(w_upper) + block-anti-diag(w_lower), via two masked broadcasts
    (no per-group scatters).  TODO(synk): cache per parameter set across calls."""
    dy, do, di = w_upper.shape
    eye = jnp.eye(dy, dtype=w_upper.dtype)
    diag = w_upper[:, :, None, :] * eye[:, None, :, None]          # (dy,do,dy,di)
    anti = w_lower[:, :, None, :] * eye[::-1][:, None, :, None]    # block (g, dy-1-g)
    return (diag + anti).reshape(dy * do, dy * di).astype(dtype)


def _dyad_dense(x, w_upper, w_lower, bias, io_dtype):
    dy, do, di = w_upper.shape
    kd, n = dy * di, x.shape[1]
    od = dy * do
    dtype = io_dtype if io_dtype is not None else x.dtype
    elt = jnp.dtype(dtype).itemsize

    w_dense = _build_dense_weight(w_upper, w_lower, dtype)
    x = x.astype(dtype)

    budget, vmem_limit = _vmem_budget()
    per_col = 2 * elt * (kd + od)                 # double-buffered x + out columns
    fixed = 2 * od * kd * elt + od * 128 * 4      # resident weight (+ padded bias)
    tn = _pick_tn(n, per_col, fixed, budget)
    grid = (pl.cdiv(n, tn),)

    in_specs = [
        pl.BlockSpec((od, kd), lambda nb: (0, 0)),   # weight: resident, no re-DMA
        pl.BlockSpec((kd, tn), lambda nb: (0, nb)),  # x tile (lane-dense)
    ]
    args = [w_dense, x]
    if bias is not None:
        in_specs.append(pl.BlockSpec((od, 1), lambda nb: (0, 0)))
        args.append(bias.reshape(od, 1).astype(jnp.float32))   # bias add stays f32
        kernel = _dense_bias_kernel
    else:
        kernel = _dense_kernel

    cost = pl.CostEstimate(
        flops=2 * od * kd * n,
        transcendentals=0,
        bytes_accessed=elt * (kd * n + od * n + od * kd)
                       + (4 * od if bias is not None else 0))

    return pl.pallas_call(
        kernel,
        out_shape=jax.ShapeDtypeStruct((od, n), dtype),
        grid=grid,
        in_specs=in_specs,
        out_specs=pl.BlockSpec((od, tn), lambda nb: (0, nb)),
        compiler_params=pltpu.CompilerParams(
            dimension_semantics=("parallel",),
            vmem_limit_bytes=vmem_limit),
        cost_estimate=cost,
    )(*args)


# ---------------------------------------------------------------------------
# Pair-fused fallback for large dy: one grid step per (g, dy-1-g) pair.
# Each pair reads x[g] and x[dy-1-g] once and runs a single K=2*di matmul
# against the prebuilt (2*do, 2*di) pair weight [[wu[g], wl[g]], [wl[h], wu[h]]].
# ---------------------------------------------------------------------------

def _pair_kernel(w_ref, xt_ref, xb_ref, o_ref):
    xp = jnp.concatenate([xt_ref[0], xb_ref[0]], axis=0)        # (2*di, tn)
    o_ref[0] = jnp.dot(w_ref[0], xp,
                       preferred_element_type=jnp.float32).astype(o_ref.dtype)


def _pair_bias_kernel(w_ref, xt_ref, xb_ref, b_ref, o_ref):
    xp = jnp.concatenate([xt_ref[0], xb_ref[0]], axis=0)
    acc = jnp.dot(w_ref[0], xp, preferred_element_type=jnp.float32) + b_ref[0]
    o_ref[0] = acc.astype(o_ref.dtype)


def _build_pair_weights(w_upper, w_lower, dtype):
    dy, do, di = w_upper.shape
    npair = (dy + 1) // 2
    g = jnp.arange(npair)
    h = dy - 1 - g
    top = jnp.concatenate([w_upper[g], w_lower[g]], axis=2)     # (npair, do, 2*di)
    bot = jnp.concatenate([w_lower[h], w_upper[h]], axis=2)
    return jnp.concatenate([top, bot], axis=1).astype(dtype)    # (npair, 2*do, 2*di)


def _dyad_grouped(x, w_upper, w_lower, bias, io_dtype):
    dy, do, di = w_upper.shape
    n = x.shape[1]
    npair = (dy + 1) // 2
    dtype = io_dtype if io_dtype is not None else x.dtype
    elt = jnp.dtype(dtype).itemsize

    xg = x.reshape(dy, di, n).astype(dtype)
    w_pairs = _build_pair_weights(w_upper, w_lower, dtype)

    budget, vmem_limit = _vmem_budget()
    per_col = 2 * elt * (2 * di + 2 * do)          # 2 x-tiles + pair-out, dbl-buffered
    fixed = 2 * (4 * do * di) * elt + 2 * do * 128 * 4
    tn = _pick_tn(n, per_col, fixed, budget)
    grid = (npair, pl.cdiv(n, tn))

    in_specs = [
        pl.BlockSpec((1, 2 * do, 2 * di), lambda p, nb: (p, 0, 0)),       # pair weight
        pl.BlockSpec((1, di, tn), lambda p, nb: (p, 0, nb)),              # x[g]
        pl.BlockSpec((1, di, tn), lambda p, nb: (dy - 1 - p, 0, nb)),     # x[dy-1-g]
    ]
    args = [w_pairs, xg, xg]
    if bias is not None:
        bg = bias.reshape(dy, do).astype(jnp.float32)
        g_idx = jnp.arange(npair)
        b_pairs = jnp.concatenate([bg[g_idx], bg[dy - 1 - g_idx]], axis=1)
        in_specs.append(pl.BlockSpec((1, 2 * do, 1), lambda p, nb: (p, 0, 0)))
        args.append(b_pairs.reshape(npair, 2 * do, 1))
        kernel = _pair_bias_kernel
    else:
        kernel = _pair_kernel

    cost = pl.CostEstimate(
        flops=2 * npair * (2 * do) * (2 * di) * n,
        transcendentals=0,
        bytes_accessed=elt * (dy * di * n + npair * 2 * do * n
                              + npair * 4 * do * di))

    out_pairs = pl.pallas_call(
        kernel,
        out_shape=jax.ShapeDtypeStruct((npair, 2 * do, n), dtype),
        grid=grid,
        in_specs=in_specs,
        out_specs=pl.BlockSpec((1, 2 * do, tn), lambda p, nb: (p, 0, nb)),
        compiler_params=pltpu.CompilerParams(
            dimension_semantics=("parallel", "parallel"),
            vmem_limit_bytes=vmem_limit),
        cost_estimate=cost,
    )(*args)

    # Un-permute: pair p holds out[p] (top half) and out[dy-1-p] (bottom half).
    # For odd dy the center pair's bottom half is a duplicate and is dropped.
    top = out_pairs[:, :do, :]                               # groups 0..npair-1
    bot = jnp.flip(out_pairs[:dy // 2, do:, :], axis=0)      # groups npair..dy-1
    return jnp.concatenate([top, bot], axis=0).reshape(dy * do, n)


# ---------------------------------------------------------------------------
# Public wrapper + reference.
# ---------------------------------------------------------------------------

def dyad_forward(x, w_upper, w_lower, bias=None, *, force_grouped=False,
                 io_dtype=None):
    """x: (dy*di, N) f32; w_upper/w_lower: (dy, do, di) f32; bias: (dy*do,) or None.

    io_dtype: optional I/O dtype (e.g. jnp.bfloat16) to halve HBM traffic;
    accumulation and bias add stay f32.  Default (None) keeps f32 end to end.
    Returns out: (dy*do, N) in io_dtype (or x.dtype).
    """
    dy, do, di = w_upper.shape
    assert x.shape[0] == dy * di, (x.shape, (dy, di))
    use_dense = (not force_grouped and dy <= _DENSE_DY_MAX
                 and dy * do <= _DENSE_MAX and dy * di <= _DENSE_MAX)
    if use_dense:
        return _dyad_dense(x, w_upper, w_lower, bias, io_dtype)
    return _dyad_grouped(x, w_upper, w_lower, bias, io_dtype)


def dyad_reference(x, w_upper, w_lower, bias=None):
    dy, do, di = w_upper.shape
    n = x.shape[1]
    xg = x.reshape(dy, di, n)
    out = (jnp.einsum("goi,gin->gon", w_upper, xg)
           + jnp.einsum("goi,gin->gon", w_lower, xg[::-1]))
    if bias is not None:
        out = out + bias.reshape(dy, do, 1)
    return out.reshape(dy * do, n)


if __name__ == "__main__":
    key = jax.random.PRNGKey(0)

    def make_inputs(k, dy, di, do, has_bias, n):
        k_wu, k_wl, k_b, k_x = jax.random.split(k, 4)
        k_init = 1.0 / float(np.sqrt(dy * di))   # mirrors torch uniform_(-k, k)
        w_upper = jax.random.uniform(k_wu, (dy, do, di), jnp.float32, -k_init, k_init)
        w_lower = jax.random.uniform(k_wl, (dy, do, di), jnp.float32, -k_init, k_init)
        bias = (jax.random.uniform(k_b, (dy * do,), jnp.float32, -k_init, k_init)
                if has_bias else None)
        x = jax.random.normal(k_x, (dy * di, n), jnp.float32)
        return x, w_upper, w_lower, bias

    configs = [
        # (dy, di, do, has_bias, N)
        (4, 16, 16, True, 256),    # DyadBlock(4, 16, 16, has_bias=True), batch 256
        (3, 8, 24, False, 160),    # odd dyad_dim (center group), no bias, ragged N
        (4, 16, 16, True, 704),    # multi-tile lane grid with a partial last tile
    ]
    keys = jax.random.split(key, len(configs))
    for cfg_key, (dy, di, do, has_bias, n) in zip(keys, configs):
        x, wu, wl, b = make_inputs(cfg_key, dy, di, do, has_bias, n)
        ref = dyad_reference(x, wu, wl, b)
        for force_grouped in (False, True):      # exercise both kernel paths
            out = dyad_forward(x, wu, wl, b, force_grouped=force_grouped)
            out = jax.block_until_ready(out)
            assert out.shape == (dy * do, n)
            np.testing.assert_allclose(np.asarray(out), np.asarray(ref),
                                       rtol=1e-5, atol=1e-5)
            # bf16 I/O fast path (halves HBM traffic); f32 accumulation, so only
            # the input/output rounding shows up -> looser tolerance.
            out16 = dyad_forward(x, wu, wl, b, force_grouped=force_grouped,
                                 io_dtype=jnp.bfloat16)
            out16 = jax.block_until_ready(out16)
            assert out16.shape == (dy * do, n)
            np.testing.assert_allclose(np.asarray(out16, dtype=np.float32),
                                       np.asarray(ref), rtol=2e-2, atol=2e-2)

    print("KERNEL_OK")
</pallas_src>

<mosaic_0001>
module attributes {stable_mosaic.version = 11 : i64} {
  func.func @_dense_bias_kernel(%arg0: i32, %arg1: memref<64x64xf32, #tpu.memory_space<vmem>>, %arg2: memref<64x256xf32, #tpu.memory_space<vmem>>, %arg3: memref<64x1xf32, #tpu.memory_space<vmem>>, %arg4: memref<64x256xf32, #tpu.memory_space<vmem>>) attributes {dimension_semantics = [#tpu.dimension_semantics<parallel>], iteration_bounds = array<i64: 1>, scalar_prefetch = 0 : i64, scratch_operands = 0 : i64, tpu.core_type = #tpu.core_type<tc>, window_params = [{pipeline_mode = #tpu.pipeline_mode<synchronous>, transform_indices = @transform_0, window_bounds = array<i64: 64, 64>}, {transform_indices = @transform_1, window_bounds = array<i64: 64, 256>}, {pipeline_mode = #tpu.pipeline_mode<synchronous>, transform_indices = @transform_2, window_bounds = array<i64: 64, 1>}, {transform_indices = @transform_3, window_bounds = array<i64: 64, 256>}]} {
    %c0 = arith.constant 0 : index
    %c0_0 = arith.constant 0 : index
    %0 = vector.load %arg1[%c0, %c0_0] : memref<64x64xf32, #tpu.memory_space<vmem>>, vector<64x64xf32>
    %c0_1 = arith.constant 0 : index
    %c0_2 = arith.constant 0 : index
    %1 = vector.load %arg2[%c0_1, %c0_2] : memref<64x256xf32, #tpu.memory_space<vmem>>, vector<64x256xf32>
    %cst = arith.constant dense<0.000000e+00> : vector<64x256xf32>
    %2 = tpu.matmul %0, %1, %cst {dimension_numbers = #tpu.dot_dimension_numbers<[1], [0], [0], [1], [0, 0, 1, 1], [], []>} : vector<64x64xf32>, vector<64x256xf32>, vector<64x256xf32> -> vector<64x256xf32>
    %c0_3 = arith.constant 0 : index
    %c0_4 = arith.constant 0 : index
    %3 = vector.load %arg3[%c0_3, %c0_4] : memref<64x1xf32, #tpu.memory_space<vmem>>, vector<64x1xf32>
    %4 = vector.broadcast %3 : vector<64x1xf32> to vector<64x256xf32>
    %5 = arith.addf %2, %4 : vector<64x256xf32>
    %c0_5 = arith.constant 0 : index
    %c0_6 = arith.constant 0 : index
    %6 = vector.load %arg4[%c0_5, %c0_6] : memref<64x256xf32, #tpu.memory_space<vmem>>, vector<64x256xf32>
    tpu.vector_store %arg4[%c0_5, %c0_6], %5 {strides = array<i32>} : memref<64x256xf32, #tpu.memory_space<vmem>>, vector<64x256xf32>,
    return
  }
  func.func @transform_0(%arg0: i32) -> (i32, i32) {
    %c0_i32 = arith.constant 0 : i32
    %c0_i32_0 = arith.constant 0 : i32
    %c0_i32_1 = arith.constant 0 : i32
    return %c0_i32, %c0_i32_0 : i32, i32
  }
  func.func @transform_1(%arg0: i32) -> (i32, i32) {
    %c0_i32 = arith.constant 0 : i32
    %c0_i32_0 = arith.constant 0 : i32
    return %c0_i32, %arg0 : i32, i32
  }
  func.func @transform_2(%arg0: i32) -> (i32, i32) {
    %c0_i32 = arith.constant 0 : i32
    %c0_i32_0 = arith.constant 0 : i32
    %c0_i32_1 = arith.constant 0 : i32
    return %c0_i32, %c0_i32_0 : i32, i32
  }
  func.func @transform_3(%arg0: i32) -> (i32, i32) {
    %c0_i32 = arith.constant 0 : i32
    %c0_i32_0 = arith.constant 0 : i32
    return %c0_i32, %arg0 : i32, i32
  }
}

</mosaic_0001>

<llo_original>
// kernel: tpu_custom_call.1
$region0: #{tpu_custom_call.1}
  #allocation0 [shape = 'u32[]', space=smem, size = 0x4, offset = 0x4, fixed_abs, tag = 'smem constant byte address 0x4 - core index']
  #allocation1 [shape = 'u32[72,128]{1,0:T(1,128)}', space=vmem, size = 0x9000, scoped, tag = 'internal scratch']
  %s0 = inlined_call_operand.vmem [shape: f32[64,64], index: 0, kind: input, shape index: {}]
  %s1 = inlined_call_operand.hbm [shape: f32[64,256], index: 1, kind: input, shape index: {}]
  %s2 = inlined_call_operand.vmem [shape: f32[64,1], index: 2, kind: input, shape index: {}]
  %s3 = inlined_call_operand.hbm [shape: f32[64,256], index: 3, kind: output, shape index: {}]
  %s4 = sld [smem:[#allocation0]]
  $region26: #{tpu_custom_call.1} parent=0
    _
  %s6 = ssub.s32 1, %s4
  %s7 = scalar_select 0, %s6, %s4
  $region1: #{tpu_custom_call.1} parent=0
    #allocation2 [shape = 'u8[65536]{0}', space=vmem, size = 0x10000, scoped, tag = 'input window, operand 1, single buffered']
    #allocation3 [shape = 's32[1]{0}', space=sflag, size = 0x4, scoped, tag = 'scoped memory for tpu_custom_call.1']
    #allocation4 [shape = 's32[1]{0}', space=sflag, size = 0x4, scoped, tag = 'scoped memory for tpu_custom_call.1']
    #allocation5 [shape = 'u8[65536]{0}', space=vmem, size = 0x10000, scoped, tag = 'output window, operand 0, single buffered']
    %8 = vsyncpa [#allocation3], 0
    %9 = vsyncpa [#allocation4], 0
    // Predicated region
    $region2: #{tpu_custom_call.1} parent=1 // pred_check
      _
    $region3: #{tpu_custom_call.1} parent=1 // pred_check_branch
      %11 = sbr.rel (0) target = $region5
    $region4: #{tpu_custom_call.1} parent=1 // pred_region
      _
    $region5: #{tpu_custom_call.1} parent=1 // pred_fallthru
      _
    // Predicated region
    $region6: #{tpu_custom_call.1} parent=1 // pred_check
      _
    $region7: #{tpu_custom_call.1} parent=1 // pred_check_branch
      %13 = sbr.rel (0) target = $region9
    $region8: #{tpu_custom_call.1} parent=1 // pred_region
      %15 = vsyncadd [#allocation3], 0
      %s16 = sshll.u32 %s1, 4
      %s17 = int_to_ptr.hbm [resolvable:$true] %s16
      %s18 = sshll.u32 [#allocation2], 4
      %s19 = int_to_ptr.vmem [resolvable:$true] %s18
      %24 = dma.hbm_to_vmem [thread:$0]  %s17, 2048, %s19, [#allocation3], 256, 256, 16
    $region9: #{tpu_custom_call.1} parent=1 // pred_fallthru
      _
    // Predicated region
    $region10: #{tpu_custom_call.1} parent=1 // pred_check
      _
    $region11: #{tpu_custom_call.1} parent=1 // pred_check_branch
      %26 = sbr.rel (0) target = $region13
    $region12: #{tpu_custom_call.1} parent=1 // pred_region
      _
    $region13: #{tpu_custom_call.1} parent=1 // pred_fallthru
      _
    // Predicated region
    $region14: #{tpu_custom_call.1} parent=1 // pred_check
      _
    $region15: #{tpu_custom_call.1} parent=1 // pred_check_branch
      %28 = sbr.rel (0) target = $region17
    $region16: #{tpu_custom_call.1} parent=1 // pred_region
      %30 = dma.done [#allocation3], 2048
    $region17: #{tpu_custom_call.1} parent=1 // pred_fallthru
      _
    %v31 = vld [vmem:[%s0] sm:$0xff]
    %v32 = vld [vmem:[%s0 + $0x8] sm:$0xff]
    %v33 = vld [vmem:[%s0 + $0x10] sm:$0xff]
    %v34 = vld [vmem:[%s0 + $0x18] sm:$0xff]
    %v35 = vld [vmem:[%s0 + $0x20] sm:$0xff]
    %v36 = vld [vmem:[%s0 + $0x28] sm:$0xff]
    %v37 = vld [vmem:[%s0 + $0x30] sm:$0xff]
    %v38 = vld [vmem:[%s0 + $0x38] sm:$0xff]
    %v39 = vld [vmem:[#allocation2] sm:$0xff]
    %v40 = vld [vmem:[#allocation2 + $0x8] sm:$0xff]
    %v41 = vld [vmem:[#allocation2 + $0x10] sm:$0xff]
    %v42 = vld [vmem:[#allocation2 + $0x18] sm:$0xff]
    %v43 = vld [vmem:[#allocation2 + $0x20] sm:$0xff]
    %v44 = vld [vmem:[#allocation2 + $0x28] sm:$0xff]
    %v45 = vld [vmem:[#allocation2 + $0x30] sm:$0xff]
    %v46 = vld [vmem:[#allocation2 + $0x38] sm:$0xff]
    %v47 = vld [vmem:[#allocation2 + $0x40] sm:$0xff]
    %v48 = vld [vmem:[#allocation2 + $0x48] sm:$0xff]
    %v49 = vld [vmem:[#allocation2 + $0x50] sm:$0xff]
    %v50 = vld [vmem:[#allocation2 + $0x58] sm:$0xff]
    %v51 = vld [vmem:[#allocation2 + $0x60] sm:$0xff]
    %v52 = vld [vmem:[#allocation2 + $0x68] sm:$0xff]
    %v53 = vld [vmem:[#allocation2 + $0x70] sm:$0xff]
    %v54 = vld [vmem:[#allocation2 + $0x78] sm:$0xff]
    %v55 = vld [vmem:[%s2] sm:$0xff]
    %v56 = vld [vmem:[%s2 + $0x8] sm:$0xff]
    %v57 = vld [vmem:[%s2 + $0x10] sm:$0xff]
    %v58 = vld [vmem:[%s2 + $0x18] sm:$0xff]
    %v59 = vld [vmem:[%s2 + $0x20] sm:$0xff]
    %v60 = vld [vmem:[%s2 + $0x28] sm:$0xff]
    %v61 = vld [vmem:[%s2 + $0x30] sm:$0xff]
    %v62 = vld [vmem:[%s2 + $0x38] sm:$0xff]
    %64 = vset.pattern.permute.xlu0 0
    %65 = vperm.xlu0 %64, %v55
    %v66 = vpop.permute.xlu0 %65
    %69 = vset.pattern.permute.xlu0 0
    %70 = vperm.xlu0 %69, %v56
    %v71 = vpop.permute.xlu0 %70
    %74 = vset.pattern.permute.xlu0 0
    %75 = vperm.xlu0 %74, %v57
    %v76 = vpop.permute.xlu0 %75
    %79 = vset.pattern.permute.xlu0 0
    %80 = vperm.xlu0 %79, %v58
    %v81 = vpop.permute.xlu0 %80
    %84 = vset.pattern.permute.xlu0 0
    %85 = vperm.xlu0 %84, %v59
    %v86 = vpop.permute.xlu0 %85
    %89 = vset.pattern.permute.xlu0 0
    %90 = vperm.xlu0 %89, %v60
    %v91 = vpop.permute.xlu0 %90
    %94 = vset.pattern.permute.xlu0 0
    %95 = vperm.xlu0 %94, %v61
    %v96 = vpop.permute.xlu0 %95
    %99 = vset.pattern.permute.xlu0 0
    %100 = vperm.xlu0 %99, %v62
    %v101 = vpop.permute.xlu0 %100
    %vm103 = vcmask 523264
    %v105 = vsel %vm103, %v31, 0
    %v108 = vsel %vm103, %v32, 0
    %v111 = vsel %vm103, %v33, 0
    %v114 = vsel %vm103, %v34, 0
    %v117 = vsel %vm103, %v35, 0
    %v120 = vsel %vm103, %v36, 0
    %v123 = vsel %vm103, %v37, 0
    %v126 = vsel %vm103, %v38, 0
    %128 = vmatpush.msra.mxu0 0.0
    %129 = vmatpush.msra.mxu0 0.0
    %130 = vmatpush.msra.mxu0 0.0
    %131 = vmatpush.msra.mxu0 0.0
    %132 = vmatpush.msra.mxu0 0.0
    %133 = vmatpush.msra.mxu0 0.0
    %134 = vmatpush.msra.mxu0 0.0
    %135 = vmatpush.msra.mxu0 0.0
    %136 = vmatpush.msra.mxu0 %v53
    %137 = vmatpush.msra.mxu0 %v51
    %138 = vmatpush.msra.mxu0 %v49
    %139 = vmatpush.msra.mxu0 %v47
    %140 = vmatpush.msra.mxu0 %v45
    %141 = vmatpush.msra.mxu0 %v43
    %142 = vmatpush.msra.mxu0 %v41
    %143 = vmatpush.msra.mxu0 %v39
    %144 = vmatmul.f32.gmra.mxu0 %v105
    %v145 = vpop.f32.mrf.mxu0
    %v146 = vadd.f32 %v66, %v145
    %147 = vmatmul.f32.gmra.mxu0 %v108
    %v148 = vpop.f32.mrf.mxu0
    %v149 = vadd.f32 %v71, %v148
    %150 = vmatmul.f32.gmra.mxu0 %v111
    %v151 = vpop.f32.mrf.mxu0
    %v152 = vadd.f32 %v76, %v151
    %153 = vmatmul.f32.gmra.mxu0 %v114
    %v154 = vpop.f32.mrf.mxu0
    %v155 = vadd.f32 %v81, %v154
    %156 = vmatmul.f32.gmra.mxu0 %v117
    %v157 = vpop.f32.mrf.mxu0
    %v158 = vadd.f32 %v86, %v157
    %159 = vmatmul.f32.gmra.mxu0 %v120
    %v160 = vpop.f32.mrf.mxu0
    %v161 = vadd.f32 %v91, %v160
    %162 = vmatmul.f32.gmra.mxu0 %v123
    %v163 = vpop.f32.mrf.mxu0
    %v164 = vadd.f32 %v96, %v163
    %165 = vmatmul.f32.gmra.mxu0 %v126
    %v166 = vpop.f32.mrf.mxu0
    %v167 = vadd.f32 %v101, %v166
    %168 = vdwg.mxu0
    %169 = vmatpush.msra.mxu0 0.0
    %170 = vmatpush.msra.mxu0 0.0
    %171 = vmatpush.msra.mxu0 0.0
    %172 = vmatpush.msra.mxu0 0.0
    %173 = vmatpush.msra.mxu0 0.0
    %174 = vmatpush.msra.mxu0 0.0
    %175 = vmatpush.msra.mxu0 0.0
    %176 = vmatpush.msra.mxu0 0.0
    %177 = vmatpush.msra.mxu0 %v54
    %178 = vmatpush.msra.mxu0 %v52
    %179 = vmatpush.msra.mxu0 %v50
    %180 = vmatpush.msra.mxu0 %v48
    %181 = vmatpush.msra.mxu0 %v46
    %182 = vmatpush.msra.mxu0 %v44
    %183 = vmatpush.msra.mxu0 %v42
    %184 = vmatpush.msra.mxu0 %v40
    %185 = vmatmul.f32.gmra.mxu0 %v105
    %v186 = vpop.f32.mrf.mxu0
    %v187 = vadd.f32 %v66, %v186
    %188 = vmatmul.f32.gmra.mxu0 %v108
    %v189 = vpop.f32.mrf.mxu0
    %v190 = vadd.f32 %v71, %v189
    %191 = vmatmul.f32.gmra.mxu0 %v111
    %v192 = vpop.f32.mrf.mxu0
    %v193 = vadd.f32 %v76, %v192
    %194 = vmatmul.f32.gmra.mxu0 %v114
    %v195 = vpop.f32.mrf.mxu0
    %v196 = vadd.f32 %v81, %v195
    %197 = vmatmul.f32.gmra.mxu0 %v117
    %v198 = vpop.f32.mrf.mxu0
    %v199 = vadd.f32 %v86, %v198
    %200 = vmatmul.f32.gmra.mxu0 %v120
    %v201 = vpop.f32.mrf.mxu0
    %v202 = vadd.f32 %v91, %v201
    %203 = vmatmul.f32.gmra.mxu0 %v123
    %v204 = vpop.f32.mrf.mxu0
    %v205 = vadd.f32 %v96, %v204
    %206 = vmatmul.f32.gmra.mxu0 %v126
    %v207 = vpop.f32.mrf.mxu0
    %v208 = vadd.f32 %v101, %v207
    %209 = vdwg.mxu0
    %210 = vst [vmem:[#allocation5] sm:$0xff] %v146
    %211 = vst [vmem:[#allocation5 + $0x8] sm:$0xff] %v187
    %212 = vst [vmem:[#allocation5 + $0x10] sm:$0xff] %v149
    %213 = vst [vmem:[#allocation5 + $0x18] sm:$0xff] %v190
    %214 = vst [vmem:[#allocation5 + $0x20] sm:$0xff] %v152
    %215 = vst [vmem:[#allocation5 + $0x28] sm:$0xff] %v193
    %216 = vst [vmem:[#allocation5 + $0x30] sm:$0xff] %v155
    %217 = vst [vmem:[#allocation5 + $0x38] sm:$0xff] %v196
    %218 = vst [vmem:[#allocation5 + $0x40] sm:$0xff] %v158
    %219 = vst [vmem:[#allocation5 + $0x48] sm:$0xff] %v199
    %220 = vst [vmem:[#allocation5 + $0x50] sm:$0xff] %v161
    %221 = vst [vmem:[#allocation5 + $0x58] sm:$0xff] %v202
    %222 = vst [vmem:[#allocation5 + $0x60] sm:$0xff] %v164
    %223 = vst [vmem:[#allocation5 + $0x68] sm:$0xff] %v205
    %224 = vst [vmem:[#allocation5 + $0x70] sm:$0xff] %v167
    %225 = vst [vmem:[#allocation5 + $0x78] sm:$0xff] %v208
    // Predicated region
    $region18: #{tpu_custom_call.1} parent=1 // pred_check
      _
    $region19: #{tpu_custom_call.1} parent=1 // pred_check_branch
      %227 = sbr.rel (0) target = $region21
    $region20: #{tpu_custom_call.1} parent=1 // pred_region
      %229 = vsyncadd [#allocation4], 0
      %s230 = sshll.u32 [#allocation5], 4
      %s231 = int_to_ptr.vmem [resolvable:$true] %s230
      %s232 = sshll.u32 %s3, 4
      %s233 = int_to_ptr.hbm [resolvable:$true] %s232
      %238 = dma.vmem_to_hbm [thread:$0]  %s231, 2048, %s233, [#allocation4], 256, 256, 16
    $region21: #{tpu_custom_call.1} parent=1 // pred_fallthru
      _
    // Predicated region
    $region22: #{tpu_custom_call.1} parent=1 // pred_check
      _
    $region23: #{tpu_custom_call.1} parent=1 // pred_check_branch
      %240 = sbr.rel (0) target = $region25
    $region24: #{tpu_custom_call.1} parent=1 // pred_region
      %242 = dma.done [#allocation4], 2048
    $region25: #{tpu_custom_call.1} parent=1 // pred_fallthru
      _
    %243 = vsyncpa [#allocation3], 1
    %244 = vsyncpa [#allocation4], 1

</llo_original>
